<compile_context>
chip_gen: v6e
topology: v6e:2x2x1
jax: 0.10.0
libtpu: 0.0.40
codegen_flags: <defaults>
</compile_context>

<pallas_src>
import functools
import math

import jax
import jax.numpy as jnp
from jax.experimental import pallas as pl
from jax.experimental.pallas import tpu as pltpu

CLIP_SIZE = 512          # transform width (fixed by the module)
LN_EPS = 1e-12
_INV_CLIP = 1.0 / CLIP_SIZE


def _gelu_erf(x):
    # exact erf-based gelu matching the PyTorch reference
    return x * 0.5 * (1.0 + jax.lax.erf(x / math.sqrt(2.0)))


def _round_up(x, m):
    return ((x + m - 1) // m) * m


def _vmem_capacity_bytes():
    try:
        return int(pltpu.get_tpu_info().vmem_capacity_bytes)
    except Exception:
        return 64 * 1024 * 1024     # conservative (v7x-sized) fallback


def _select_config(compute_dtype):
    """Per-generation (tm, tv, vmem_limit) so large tiles never overrun VMEM."""
    itemsize = jnp.dtype(compute_dtype).itemsize
    vmem = _vmem_capacity_bytes()
    if vmem >= 100 * 1024 * 1024:          # v5e / v6e: 128 MiB physical VMEM
        tm, tv = 1024, 2048
        limit = 96 * 1024 * 1024
    else:                                  # v7x: 64 MiB physical VMEM
        tm = 1024 if itemsize <= 2 else 512
        tv = 2048
        limit = 48 * 1024 * 1024
    return tm, tv, limit


# ----------------------------------------------------------------------------
# Fused kernel: dense + gelu + LayerNorm (into VMEM scratch) -> decoder + bias
# ----------------------------------------------------------------------------
def mlm_head_kernel(x_ref, w1_ref, b1_ref, gamma_ref, beta_ref,
                    w2_ref, obias_ref, out_ref, h_scratch):
    # grid = (num_row_blocks, num_vocab_blocks); j (vocab) is the inner,
    # "arbitrary" axis.
    #   x_ref:     (tm, H)        row tile of the flattened input
    #   w1_ref:    (H, 512)       dense weight, pre-transposed, compute dtype
    #   b1/gamma/beta: (1, 512)   f32
    #   w2_ref:    (512, tv)      decoder weight tile, pre-transposed/padded
    #   obias_ref: (1, tv)        f32 (pre-padded)
    #   h_scratch: (tm, 512)      compute-dtype transform result, resident
    #                             across the j loop

    @pl.when(pl.program_id(1) == 0)
    def _():
        # dense: (tm, H) x (H, 512) -> (tm, 512), f32 accumulation on the MXU
        x = x_ref[...].astype(w1_ref.dtype)
        h = jnp.dot(x, w1_ref[...], preferred_element_type=jnp.float32)
        h = h + b1_ref[...]
        h = _gelu_erf(h)
        # LayerNorm in f32 (biased variance, eps inside rsqrt)
        mean = jnp.sum(h, axis=-1, keepdims=True) * _INV_CLIP
        centered = h - mean
        var = jnp.sum(centered * centered, axis=-1, keepdims=True) * _INV_CLIP
        inv = jax.lax.rsqrt(var + LN_EPS)
        hn = centered * inv * gamma_ref[...] + beta_ref[...]
        h_scratch[...] = hn.astype(h_scratch.dtype)

    # decoder: (tm, 512) x (512, tv) -> (tm, tv), f32 accumulation
    scores = jnp.dot(h_scratch[...], w2_ref[...],
                     preferred_element_type=jnp.float32)
    out_ref[...] = (scores + obias_ref[...]).astype(out_ref.dtype)


# ----------------------------------------------------------------------------
# Jitted forward (arrays are runtime args; tile config is static)
# ----------------------------------------------------------------------------
@functools.partial(jax.jit,
                   static_argnames=("tm", "tv", "vocab_size",
                                    "vmem_limit_bytes"))
def _mlm_head_forward(sequence_output, dense_w_t, dense_b, ln_gamma, ln_beta,
                      decoder_w_t, out_bias, *, tm, tv, vocab_size,
                      vmem_limit_bytes):
    B, S, H = sequence_output.shape
    M = B * S
    V = vocab_size
    V_pad = decoder_w_t.shape[1]
    assert V_pad % tv == 0 and V_pad >= V

    # Row tile: clamp for small M; if one row block would cover everything but
    # there is real work, split in two so the "parallel" axis can shard across
    # both v7x TensorCores.
    tm_eff = min(tm, _round_up(M, 8))
    if pl.cdiv(M, tm_eff) == 1 and M >= 1024:
        tm_eff = _round_up(pl.cdiv(M, 2), 8)

    num_i = pl.cdiv(M, tm_eff)      # ragged last row block allowed
    num_j = V_pad // tv             # == cdiv(V, tv); last output block ragged

    x = sequence_output.reshape(M, H)
    out_dtype = sequence_output.dtype

    in_item = jnp.dtype(sequence_output.dtype).itemsize
    w_item = jnp.dtype(decoder_w_t.dtype).itemsize
    out_item = jnp.dtype(out_dtype).itemsize
    cost = pl.CostEstimate(
        flops=2 * M * CLIP_SIZE * (H + V_pad),
        transcendentals=M * CLIP_SIZE,                  # erf in gelu
        bytes_accessed=(
            M * H * in_item                             # activations
            + H * CLIP_SIZE * w_item + 3 * CLIP_SIZE * 4
            + num_i * V_pad * CLIP_SIZE * w_item        # decoder w re-stream
            + V_pad * 4                                 # output bias
            + M * V * out_item                          # logits
        ),
    )

    out = pl.pallas_call(
        mlm_head_kernel,
        out_shape=jax.ShapeDtypeStruct((M, V), out_dtype),
        grid_spec=pltpu.PrefetchScalarGridSpec(
            num_scalar_prefetch=0,
            grid=(num_i, num_j),
            in_specs=[
                pl.BlockSpec((tm_eff, H), lambda i, j: (i, 0)),
                pl.BlockSpec((H, CLIP_SIZE), lambda i, j: (0, 0)),
                pl.BlockSpec((1, CLIP_SIZE), lambda i, j: (0, 0)),
                pl.BlockSpec((1, CLIP_SIZE), lambda i, j: (0, 0)),
                pl.BlockSpec((1, CLIP_SIZE), lambda i, j: (0, 0)),
                pl.BlockSpec((CLIP_SIZE, tv), lambda i, j: (0, j)),
                pl.BlockSpec((1, tv), lambda i, j: (0, j)),
            ],
            out_specs=pl.BlockSpec((tm_eff, tv), lambda i, j: (i, j)),
            scratch_shapes=[pltpu.VMEM((tm_eff, CLIP_SIZE),
                                       decoder_w_t.dtype)],
        ),
        compiler_params=pltpu.CompilerParams(
            dimension_semantics=("parallel", "arbitrary"),
            vmem_limit_bytes=vmem_limit_bytes,
        ),
        cost_estimate=cost,
    )(x, dense_w_t, dense_b, ln_gamma, ln_beta, decoder_w_t, out_bias)

    return out.reshape(B, S, V)


# ----------------------------------------------------------------------------
# One-time parameter prep + callable builder (do this ONCE, not per step)
# ----------------------------------------------------------------------------
def make_mlm_head(params, *, compute_dtype=jnp.bfloat16, tm=None, tv=None):
    """Prepare (transpose / cast / pad) parameters once and return the forward fn.

    params:
      dense_w   (512, H)   nn.Linear(hidden, 512) weight
      dense_b   (512,)
      ln_gamma  (512,)     LayerNorm weight
      ln_beta   (512,)     LayerNorm bias
      decoder_w (V, 512)   nn.Linear(512, V, bias=False) weight
      out_bias  (V,)       separate vocab bias parameter
    """
    tm_cfg, tv_cfg, vmem_limit = _select_config(compute_dtype)
    if tm is not None:
        tm_cfg = tm
    if tv is not None:
        tv_cfg = tv

    V = params["decoder_w"].shape[0]
    cdt = jnp.dtype(compute_dtype)

    # Vocab tile: clamp for small vocabs, pad the decoder weight/bias once so
    # every weight block is fully in-bounds; the OUTPUT stays un-padded and its
    # last (partial) block is masked on store by Pallas.
    tv_eff = min(tv_cfg, _round_up(V, 128))
    V_pad = _round_up(V, tv_eff)

    dense_w_t = jnp.asarray(params["dense_w"]).T.astype(cdt)        # (H, 512)
    dense_b = jnp.asarray(params["dense_b"], jnp.float32).reshape(1, CLIP_SIZE)
    ln_gamma = jnp.asarray(params["ln_gamma"], jnp.float32).reshape(1, CLIP_SIZE)
    ln_beta = jnp.asarray(params["ln_beta"], jnp.float32).reshape(1, CLIP_SIZE)
    decoder_w_t = jnp.asarray(params["decoder_w"]).T.astype(cdt)    # (512, V)
    out_bias = jnp.asarray(params["out_bias"], jnp.float32).reshape(1, V)
    if V_pad != V:
        decoder_w_t = jnp.pad(decoder_w_t, ((0, 0), (0, V_pad - V)))
        out_bias = jnp.pad(out_bias, ((0, 0), (0, V_pad - V)))

    fwd = functools.partial(_mlm_head_forward, tm=tm_cfg, tv=tv_eff,
                            vocab_size=V, vmem_limit_bytes=vmem_limit)

    def forward(sequence_output):
        return fwd(sequence_output, dense_w_t, dense_b, ln_gamma, ln_beta,
                   decoder_w_t, out_bias)

    return forward


# ----------------------------------------------------------------------------
# Pure-JAX f32 reference for correctness check
# ----------------------------------------------------------------------------
def reference(sequence_output, params):
    x = sequence_output.astype(jnp.float32)
    h = x @ params["dense_w"].astype(jnp.float32).T + params["dense_b"]
    h = _gelu_erf(h)
    mean = jnp.mean(h, axis=-1, keepdims=True)
    var = jnp.mean((h - mean) ** 2, axis=-1, keepdims=True)
    h = (h - mean) * jax.lax.rsqrt(var + LN_EPS)
    h = h * params["ln_gamma"] + params["ln_beta"]
    return h @ params["decoder_w"].astype(jnp.float32).T + params["out_bias"]


if __name__ == "__main__":
    # Small shapes: B=2, S=8, hidden=128, vocab=1000.
    # vocab deliberately NOT a multiple of 128 to exercise the ragged
    # (pre-padded weight / masked partial output block) path.
    B, S, H, V = 2, 8, 128, 1000

    key = jax.random.PRNGKey(0)
    k_x, k_w1, k_b1, k_g, k_bt, k_w2, k_ob = jax.random.split(key, 7)

    sequence_output = jax.random.normal(k_x, (B, S, H), dtype=jnp.float32)

    params = {
        # nn.Linear(hidden_size, 512): weight shape (512, hidden)
        "dense_w": jax.random.normal(k_w1, (CLIP_SIZE, H), jnp.float32) * 0.02,
        "dense_b": jax.random.normal(k_b1, (CLIP_SIZE,), jnp.float32) * 0.02,
        # LayerNorm(512)
        "ln_gamma": jnp.ones((CLIP_SIZE,), jnp.float32)
        + 0.1 * jax.random.normal(k_g, (CLIP_SIZE,), jnp.float32),
        "ln_beta": 0.1 * jax.random.normal(k_bt, (CLIP_SIZE,), jnp.float32),
        # nn.Linear(512, vocab_size, bias=False): weight shape (vocab, 512)
        "decoder_w": jax.random.normal(k_w2, (V, CLIP_SIZE), jnp.float32) * 0.02,
        # separate nn.Parameter bias of shape (vocab,)
        "out_bias": 0.02 * jax.random.normal(k_ob, (V,), jnp.float32),
    }

    ref = reference(sequence_output, params)

    # --- f32 path: tight numerical check --------------------------------
    head_f32 = make_mlm_head(params, compute_dtype=jnp.float32, tv=256)
    out_f32 = jax.block_until_ready(head_f32(sequence_output))
    assert out_f32.shape == (B, S, V), out_f32.shape
    assert jnp.allclose(out_f32, ref, atol=1e-4, rtol=1e-4), (
        float(jnp.max(jnp.abs(out_f32 - ref))))

    # --- bf16 path (production config): relaxed tolerance ----------------
    head_bf16 = make_mlm_head(params, compute_dtype=jnp.bfloat16, tv=256)
    out_bf16 = jax.block_until_ready(
        head_bf16(sequence_output.astype(jnp.bfloat16)))
    assert out_bf16.shape == (B, S, V), out_bf16.shape
    assert out_bf16.dtype == jnp.bfloat16, out_bf16.dtype
    assert jnp.allclose(out_bf16.astype(jnp.float32), ref,
                        atol=5e-2, rtol=5e-2), (
        float(jnp.max(jnp.abs(out_bf16.astype(jnp.float32) - ref))))

    print("KERNEL_OK")
</pallas_src>

<mosaic_0001>
module attributes {stable_mosaic.version = 11 : i64} {
  func.func @mlm_head_kernel(%arg0: i32, %arg1: i32, %arg2: memref<16x128xf32, #tpu.memory_space<vmem>>, %arg3: memref<128x512xf32, #tpu.memory_space<vmem>>, %arg4: memref<1x512xf32, #tpu.memory_space<vmem>>, %arg5: memref<1x512xf32, #tpu.memory_space<vmem>>, %arg6: memref<1x512xf32, #tpu.memory_space<vmem>>, %arg7: memref<512x256xf32, #tpu.memory_space<vmem>>, %arg8: memref<1x256xf32, #tpu.memory_space<vmem>>, %arg9: memref<16x256xf32, #tpu.memory_space<vmem>>, %arg10: memref<16x512xf32, #tpu.memory_space<vmem>>) attributes {dimension_semantics = [#tpu.dimension_semantics<parallel>, #tpu.dimension_semantics<arbitrary>], iteration_bounds = array<i64: 1, 4>, scalar_prefetch = 0 : i64, scratch_operands = 1 : i64, tpu.core_type = #tpu.core_type<tc>, window_params = [{transform_indices = @transform_0, window_bounds = array<i64: 16, 128>}, {pipeline_mode = #tpu.pipeline_mode<synchronous>, transform_indices = @transform_1, window_bounds = array<i64: 128, 512>}, {pipeline_mode = #tpu.pipeline_mode<synchronous>, transform_indices = @transform_2, window_bounds = array<i64: 1, 512>}, {pipeline_mode = #tpu.pipeline_mode<synchronous>, transform_indices = @transform_3, window_bounds = array<i64: 1, 512>}, {pipeline_mode = #tpu.pipeline_mode<synchronous>, transform_indices = @transform_4, window_bounds = array<i64: 1, 512>}, {transform_indices = @transform_5, window_bounds = array<i64: 512, 256>}, {transform_indices = @transform_6, window_bounds = array<i64: 1, 256>}, {transform_indices = @transform_7, window_bounds = array<i64: 16, 256>}]} {
    %c0_i32 = arith.constant 0 : i32
    %0 = arith.cmpi eq, %arg1, %c0_i32 : i32
    %1 = arith.extui %0 : i1 to i32
    %c0_i32_0 = arith.constant 0 : i32
    %2 = arith.cmpi ne, %1, %c0_i32_0 : i32
    scf.if %2 {
      %c0_8 = arith.constant 0 : index
      %c0_9 = arith.constant 0 : index
      %10 = vector.load %arg2[%c0_8, %c0_9] : memref<16x128xf32, #tpu.memory_space<vmem>>, vector<16x128xf32>
      %c0_10 = arith.constant 0 : index
      %c0_11 = arith.constant 0 : index
      %11 = vector.load %arg3[%c0_10, %c0_11] : memref<128x512xf32, #tpu.memory_space<vmem>>, vector<128x512xf32>
      %cst_12 = arith.constant dense<0.000000e+00> : vector<16x512xf32>
      %12 = tpu.matmul %10, %11, %cst_12 {dimension_numbers = #tpu.dot_dimension_numbers<[1], [0], [0], [1], [0, 0, 1, 1], [], []>} : vector<16x128xf32>, vector<128x512xf32>, vector<16x512xf32> -> vector<16x512xf32>
      %c0_13 = arith.constant 0 : index
      %c0_14 = arith.constant 0 : index
      %13 = vector.load %arg4[%c0_13, %c0_14] : memref<1x512xf32, #tpu.memory_space<vmem>>, vector<1x512xf32>
      %14 = vector.broadcast %13 : vector<1x512xf32> to vector<16x512xf32>
      %15 = arith.addf %12, %14 : vector<16x512xf32>
      %cst_15 = arith.constant 5.000000e-01 : f32
      %16 = vector.broadcast %cst_15 : f32 to vector<16x512xf32>
      %17 = arith.mulf %15, %16 : vector<16x512xf32>
      %cst_16 = arith.constant 1.41421354 : f32
      %18 = vector.broadcast %cst_16 : f32 to vector<16x512xf32>
      %19 = arith.divf %15, %18 : vector<16x512xf32>
      %20 = math.erf %19 : vector<16x512xf32>
      %cst_17 = arith.constant 1.000000e+00 : f32
      %21 = vector.broadcast %cst_17 : f32 to vector<16x512xf32>
      %22 = arith.addf %21, %20 : vector<16x512xf32>
      %23 = arith.mulf %17, %22 : vector<16x512xf32>
      %cst_18 = arith.constant dense<0.000000e+00> : vector<16xf32>
      %24 = vector.multi_reduction <add>, %23, %cst_18 [1] : vector<16x512xf32> to vector<16xf32>
      %25 = vector.shape_cast %24 : vector<16xf32> to vector<16x1xf32>
      %cst_19 = arith.constant 0.001953125 : f32
      %26 = vector.broadcast %cst_19 : f32 to vector<16x1xf32>
      %27 = arith.mulf %25, %26 : vector<16x1xf32>
      %28 = vector.broadcast %27 : vector<16x1xf32> to vector<16x512xf32>
      %29 = arith.subf %23, %28 : vector<16x512xf32>
      %30 = arith.mulf %29, %29 : vector<16x512xf32>
      %cst_20 = arith.constant dense<0.000000e+00> : vector<16xf32>
      %31 = vector.multi_reduction <add>, %30, %cst_20 [1] : vector<16x512xf32> to vector<16xf32>
      %32 = vector.shape_cast %31 : vector<16xf32> to vector<16x1xf32>
      %cst_21 = arith.constant 0.001953125 : f32
      %33 = vector.broadcast %cst_21 : f32 to vector<16x1xf32>
      %34 = arith.mulf %32, %33 : vector<16x1xf32>
      %cst_22 = arith.constant 9.99999996E-13 : f32
      %35 = vector.broadcast %cst_22 : f32 to vector<16x1xf32>
      %36 = arith.addf %34, %35 : vector<16x1xf32>
      %37 = math.rsqrt %36 : vector<16x1xf32>
      %38 = vector.broadcast %37 : vector<16x1xf32> to vector<16x512xf32>
      %39 = arith.mulf %29, %38 : vector<16x512xf32>
      %c0_23 = arith.constant 0 : index
      %c0_24 = arith.constant 0 : index
      %40 = vector.load %arg5[%c0_23, %c0_24] : memref<1x512xf32, #tpu.memory_space<vmem>>, vector<1x512xf32>
      %41 = vector.broadcast %40 : vector<1x512xf32> to vector<16x512xf32>
      %42 = arith.mulf %39, %41 : vector<16x512xf32>
      %c0_25 = arith.constant 0 : index
      %c0_26 = arith.constant 0 : index
      %43 = vector.load %arg6[%c0_25, %c0_26] : memref<1x512xf32, #tpu.memory_space<vmem>>, vector<1x512xf32>
      %44 = vector.broadcast %43 : vector<1x512xf32> to vector<16x512xf32>
      %45 = arith.addf %42, %44 : vector<16x512xf32>
      %c0_27 = arith.constant 0 : index
      %c0_28 = arith.constant 0 : index
      %46 = vector.load %arg10[%c0_27, %c0_28] : memref<16x512xf32, #tpu.memory_space<vmem>>, vector<16x512xf32>
      tpu.vector_store %arg10[%c0_27, %c0_28], %45 {strides = array<i32>} : memref<16x512xf32, #tpu.memory_space<vmem>>, vector<16x512xf32>,
    } else {
    }
    %c0 = arith.constant 0 : index
    %c0_1 = arith.constant 0 : index
    %3 = vector.load %arg10[%c0, %c0_1] : memref<16x512xf32, #tpu.memory_space<vmem>>, vector<16x512xf32>
    %c0_2 = arith.constant 0 : index
    %c0_3 = arith.constant 0 : index
    %4 = vector.load %arg7[%c0_2, %c0_3] : memref<512x256xf32, #tpu.memory_space<vmem>>, vector<512x256xf32>
    %cst = arith.constant dense<0.000000e+00> : vector<16x256xf32>
    %5 = tpu.matmul %3, %4, %cst {dimension_numbers = #tpu.dot_dimension_numbers<[1], [0], [0], [1], [0, 0, 1, 1], [], []>} : vector<16x512xf32>, vector<512x256xf32>, vector<16x256xf32> -> vector<16x256xf32>
    %c0_4 = arith.constant 0 : index
    %c0_5 = arith.constant 0 : index
    %6 = vector.load %arg8[%c0_4, %c0_5] : memref<1x256xf32, #tpu.memory_space<vmem>>, vector<1x256xf32>
    %7 = vector.broadcast %6 : vector<1x256xf32> to vector<16x256xf32>
    %8 = arith.addf %5, %7 : vector<16x256xf32>
    %c0_6 = arith.constant 0 : index
    %c0_7 = arith.constant 0 : index
    %9 = vector.load %arg9[%c0_6, %c0_7] : memref<16x256xf32, #tpu.memory_space<vmem>>, vector<16x256xf32>
    tpu.vector_store %arg9[%c0_6, %c0_7], %8 {strides = array<i32>} : memref<16x256xf32, #tpu.memory_space<vmem>>, vector<16x256xf32>,
    return
  }
  func.func @transform_0(%arg0: i32, %arg1: i32) -> (i32, i32) {
    %c0_i32 = arith.constant 0 : i32
    %c0_i32_0 = arith.constant 0 : i32
    return %arg0, %c0_i32 : i32, i32
  }
  func.func @transform_1(%arg0: i32, %arg1: i32) -> (i32, i32) {
    %c0_i32 = arith.constant 0 : i32
    %c0_i32_0 = arith.constant 0 : i32
    %c0_i32_1 = arith.constant 0 : i32
    return %c0_i32, %c0_i32_0 : i32, i32
  }
  func.func @transform_2(%arg0: i32, %arg1: i32) -> (i32, i32) {
    %c0_i32 = arith.constant 0 : i32
    %c0_i32_0 = arith.constant 0 : i32
    %c0_i32_1 = arith.constant 0 : i32
    return %c0_i32, %c0_i32_0 : i32, i32
  }
  func.func @transform_3(%arg0: i32, %arg1: i32) -> (i32, i32) {
    %c0_i32 = arith.constant 0 : i32
    %c0_i32_0 = arith.constant 0 : i32
    %c0_i32_1 = arith.constant 0 : i32
    return %c0_i32, %c0_i32_0 : i32, i32
  }
  func.func @transform_4(%arg0: i32, %arg1: i32) -> (i32, i32) {
    %c0_i32 = arith.constant 0 : i32
    %c0_i32_0 = arith.constant 0 : i32
    %c0_i32_1 = arith.constant 0 : i32
    return %c0_i32, %c0_i32_0 : i32, i32
  }
  func.func @transform_5(%arg0: i32, %arg1: i32) -> (i32, i32) {
    %c0_i32 = arith.constant 0 : i32
    %c0_i32_0 = arith.constant 0 : i32
    return %c0_i32, %arg1 : i32, i32
  }
  func.func @transform_6(%arg0: i32, %arg1: i32) -> (i32, i32) {
    %c0_i32 = arith.constant 0 : i32
    %c0_i32_0 = arith.constant 0 : i32
    return %c0_i32, %arg1 : i32, i32
  }
  func.func @transform_7(%arg0: i32, %arg1: i32) -> (i32, i32) {
    %c0_i32 = arith.constant 0 : i32
    return %arg0, %arg1 : i32, i32
  }
}

</mosaic_0001>

<llo_original>
// kernel: _mlm_head_forward.1
$region0: #{_mlm_head_forward.1}
  #allocation0 [shape = 'u32[]', space=smem, size = 0x4, offset = 0x4, fixed_abs, tag = 'smem constant byte address 0x4 - core index']
  #allocation1 [shape = 'u32[144,128]{1,0:T(1,128)}', space=vmem, size = 0x12000, scoped, tag = 'internal scratch']
  #allocation2 [shape = 'f32[16,512]{1,0:T(8,128)}', space=vmem, size = 0x8000, scoped, tag = 'scratch operand']
  %s0 = inlined_call_operand.hbm [shape: f32[16,128], index: 0, kind: input, shape index: {}]
  %s1 = inlined_call_operand.hbm [shape: f32[128,512], index: 1, kind: input, shape index: {}]
  %s2 = inlined_call_operand.hbm [shape: f32[1,512], index: 2, kind: input, shape index: {}]
  %s3 = inlined_call_operand.hbm [shape: f32[1,512], index: 3, kind: input, shape index: {}]
  %s4 = inlined_call_operand.hbm [shape: f32[1,512], index: 4, kind: input, shape index: {}]
  %s5 = inlined_call_operand.hbm [shape: f32[512,1024], index: 5, kind: input, shape index: {}]
  %s6 = inlined_call_operand.hbm [shape: f32[1,1024], index: 6, kind: input, shape index: {}]
  %s7 = inlined_call_operand.hbm [shape: f32[16,1000], index: 7, kind: output, shape index: {}]
  %s8 = sld [smem:[#allocation0]]
  $region93: #{_mlm_head_forward.1} parent=0
    _
  %s10 = ssub.s32 1, %s8
  %s11 = scalar_select 0, %s10, %s8
  $region1: #{_mlm_head_forward.1} parent=0
    #allocation3 [shape = 'u8[8192]{0}', space=vmem, size = 0x2000, scoped, tag = 'input window, operand 0, single buffered']
    #allocation4 [shape = 's32[2]{0}', space=sflag, size = 0x8, scoped, tag = 'scoped memory for _mlm_head_forward.1']
    #allocation5 [shape = 's32[2]{0}', space=sflag, size = 0x8, scoped, tag = 'scoped memory for _mlm_head_forward.1']
    #allocation6 [shape = 'u8[262144]{0}', space=vmem, size = 0x40000, scoped, tag = 'input window, operand 1, single buffered']
    #allocation7 [shape = 's32[1]{0}', space=sflag, size = 0x4, scoped, tag = 'scoped memory for _mlm_head_forward.1']
    #allocation8 [shape = 'u8[2048]{0}', space=vmem, size = 0x800, scoped, tag = 'input window, operand 2, single buffered']
    #allocation9 [shape = 'u8[2048]{0}', space=vmem, size = 0x800, scoped, tag = 'input window, operand 3, single buffered']
    #allocation10 [shape = 's32[1]{0}', space=sflag, size = 0x4, scoped, tag = 'scoped memory for _mlm_head_forward.1']
    #allocation11 [shape = 'u8[2048]{0}', space=vmem, size = 0x800, scoped, tag = 'input window, operand 4, single buffered']
    #allocation12 [shape = 'u8[1048576]{0}', space=vmem, size = 0x100000, scoped, tag = 'input window, operand 5']
    #allocation13 [shape = 's32[2]{0}', space=sflag, size = 0x8, scoped, tag = 'scoped memory for _mlm_head_forward.1']
    #allocation14 [shape = 'u8[2048]{0}', space=vmem, size = 0x800, scoped, tag = 'input window, operand 6']
    #allocation15 [shape = 'u8[32768]{0}', space=vmem, size = 0x8000, scoped, tag = 'output window, operand 0']
    %12 = vsyncpa [#allocation4], 0
    %13 = vsyncpa [#allocation7], 0
    %14 = vsyncpa [#allocation10], 0
    %15 = vsyncpa [#allocation13], 0
    %s16 = scalar_lea.sflag [#allocation13], 1
    %17 = vsyncpa %s16, 0
    %18 = vsyncpa [#allocation5], 0
    %s19 = scalar_lea.sflag [#allocation5], 1
    %20 = vsyncpa %s19, 0
    loop: start=0, step=1, limit=6
    $region2: #{_mlm_head_forward.1} parent=1 // loop_pre_header
      _
    $region3: #{_mlm_head_forward.1} parent=1 // loop_header
      %s22 = sphi 0, %s26
      %p23 = scmp.ge.s32.totalorder %s22, 6
      %s29 = sphi 0, %s41
      %s30 = sphi 0, %s37
      %s31 = sphi 0, %s29
      %s32 = sphi 0, %s30
      %s33 = sphi 0, %s31
      %s34 = sphi 0, %s32
      %s44 = sphi 0, %s46
      %s47 = sphi 0, %s44
      %s48 = sphi 0, %s47
      %s64 = sphi 0, %s48
      %s68 = sphi 0, %s68
      %s70 = sphi 0, %s68
      %s71 = sphi 0, %s70
      %s85 = sphi 0, %s71
      %s89 = sphi 0, %s89
      %s91 = sphi 0, %s89
      %s92 = sphi 0, %s91
      %s106 = sphi 0, %s92
      %s110 = sphi 0, %s110
      %s112 = sphi 0, %s110
      %s113 = sphi 0, %s112
      %s127 = sphi 0, %s113
      %s131 = sphi 0, %s131
      %s133 = sphi 0, %s131
      %s134 = sphi 0, %s133
      %s148 = sphi 0, %s134
      %s154 = sphi 0, %s156
      %s157 = sphi 0, %s154
      %s158 = sphi 0, %s157
      %s174 = sphi 0, %s158
      %s180 = sphi 0, %s182
      %s183 = sphi 0, %s180
      %s184 = sphi 0, %s183
      %s200 = sphi 0, %s184
      %s208 = sphi 0, %s210
      %s211 = sphi 0, %s208
      %s212 = sphi 0, %s211
      %s228 = sphi 0, %s212
    $region4: #{_mlm_head_forward.1} parent=1 // loop_header_branch
      %25 = sbr.rel (%p23) target = $region8
    $region5: #{_mlm_head_forward.1} parent=1 // loop_body
      %s27 = ssub.s32 %s22, 1
      %s28 = ssub.s32 %s22, 2
      %s35 = sadd.s32 1, %s30
      %p36 = scmp.ge.s32.totalorder %s35, 4
      %s37 = scalar_select %p36, 0, %s35
      %s38 = sadd.s32 1, %s29
      %s39 = scalar_select %p36, %s38, %s29
      %p40 = scmp.ge.s32.totalorder %s39, 1
      %s41 = scalar_select %p40, 0, %s39
      %s42 = ssub.s32 %s29, %s41
      %p43 = scmp.eq.s32.totalorder %s42, 0
      %s45 = sadd.s32 %s44, 1
      %s46 = scalar_select %p43, %s44, %s45
      %p49 = pneg %p43
      %p50 = scmp.eq.s32.totalorder %s22, 3
      %p51 = por %p49, %p50
      %p52 = scmp.ne.s32.totalorder %s44, %s47
      %p53 = scmp.eq.s32.totalorder %s22, 0
      %p54 = por %p52, %p53
      %p55 = scmp.ne.s32.totalorder %s44, %s47
      %p56 = scmp.eq.s32.totalorder %s27, 3
      %p57 = por %p55, %p56
      %p58 = scmp.ne.s32.totalorder %s47, %s48
      %p59 = scmp.eq.s32.totalorder %s27, 0
      %p60 = por %p58, %p59
      %p61 = scmp.ne.s32.totalorder %s47, %s48
      %p62 = scmp.eq.s32.totalorder %s28, 3
      %p63 = por %p61, %p62
      %p65 = scmp.ne.s32.totalorder %s48, %s64
      %p66 = scmp.eq.s32.totalorder %s28, 0
      %p67 = por %p65, %p66
      %s69 = sadd.s32 %s68, 1
      %p72 = scmp.eq.s32.totalorder %s22, 3
      %p73 = scmp.ne.s32.totalorder %s68, %s70
      %p74 = scmp.eq.s32.totalorder %s22, 0
      %p75 = por %p73, %p74
      %p76 = scmp.ne.s32.totalorder %s68, %s70
      %p77 = scmp.eq.s32.totalorder %s27, 3
      %p78 = por %p76, %p77
      %p79 = scmp.ne.s32.totalorder %s70, %s71
      %p80 = scmp.eq.s32.totalorder %s27, 0
      %p81 = por %p79, %p80
      %p82 = scmp.ne.s32.totalorder %s70, %s71
      %p83 = scmp.eq.s32.totalorder %s28, 3
      %p84 = por %p82, %p83
      %p86 = scmp.ne.s32.totalorder %s71, %s85
      %p87 = scmp.eq.s32.totalorder %s28, 0
      %p88 = por %p86, %p87
      %s90 = sadd.s32 %s89, 1
      %p93 = scmp.eq.s32.totalorder %s22, 3
      %p94 = scmp.ne.s32.totalorder %s89, %s91
      %p95 = scmp.eq.s32.totalorder %s22, 0
      %p96 = por %p94, %p95
      %p97 = scmp.ne.s32.totalorder %s89, %s91
      %p98 = scmp.eq.s32.totalorder %s27, 3
      %p99 = por %p97, %p98
      %p100 = scmp.ne.s32.totalorder %s91, %s92
      %p101 = scmp.eq.s32.totalorder %s27, 0
      %p102 = por %p100, %p101
      %p103 = scmp.ne.s32.totalorder %s91, %s92
      %p104 = scmp.eq.s32.totalorder %s28, 3
      %p105 = por %p103, %p104
      %p107 = scmp.ne.s32.totalorder %s92, %s106
      %p108 = scmp.eq.s32.totalorder %s28, 0
      %p109 = por %p107, %p108
      %s111 = sadd.s32 %s110, 1
      %p114 = scmp.eq.s32.totalorder %s22, 3
      %p115 = scmp.ne.s32.totalorder %s110, %s112
      %p116 = scmp.eq.s32.totalorder %s22, 0
      %p117 = por %p115, %p116
      %p118 = scmp.ne.s32.totalorder %s110, %s112
      %p119 = scmp.eq.s32.totalorder %s27, 3
      %p120 = por %p118, %p119
      %p121 = scmp.ne.s32.totalorder %s112, %s113
      %p122 = scmp.eq.s32.totalorder %s27, 0
      %p123 = por %p121, %p122
      %p124 = scmp.ne.s32.totalorder %s112, %s113
      %p125 = scmp.eq.s32.totalorder %s28, 3
      %p126 = por %p124, %p125
      %p128 = scmp.ne.s32.totalorder %s113, %s127
      %p129 = scmp.eq.s32.totalorder %s28, 0
      %p130 = por %p128, %p129
      %s132 = sadd.s32 %s131, 1
      %p135 = scmp.eq.s32.totalorder %s22, 3
      %p136 = scmp.ne.s32.totalorder %s131, %s133
      %p137 = scmp.eq.s32.totalorder %s22, 0
      %p138 = por %p136, %p137
      %p139 = scmp.ne.s32.totalorder %s131, %s133
      %p140 = scmp.eq.s32.totalorder %s27, 3
      %p141 = por %p139, %p140
      %p142 = scmp.ne.s32.totalorder %s133, %s134
      %p143 = scmp.eq.s32.totalorder %s27, 0
      %p144 = por %p142, %p143
      %p145 = scmp.ne.s32.totalorder %s133, %s134
      %p146 = scmp.eq.s32.totalorder %s28, 3
      %p147 = por %p145, %p146
      %p149 = scmp.ne.s32.totalorder %s134, %s148
      %p150 = scmp.eq.s32.totalorder %s28, 0
      %p151 = por %p149, %p150
      %s152 = ssub.s32 %s30, %s37
      %p153 = scmp.eq.s32.totalorder %s152, 0
      %s155 = sadd.s32 %s154, 1
      %s156 = scalar_select %p153, %s154, %s155
      %p159 = pneg %p153
      %p160 = scmp.eq.s32.totalorder %s22, 3
      %p161 = por %p159, %p160
      %p162 = scmp.ne.s32.totalorder %s154, %s157
      %p163 = scmp.eq.s32.totalorder %s22, 0
      %p164 = por %p162, %p163
      %p165 = scmp.ne.s32.totalorder %s154, %s157
      %p166 = scmp.eq.s32.totalorder %s27, 3
      %p167 = por %p165, %p166
      %p168 = scmp.ne.s32.totalorder %s157, %s158
      %p169 = scmp.eq.s32.totalorder %s27, 0
      %p170 = por %p168, %p169
      %p171 = scmp.ne.s32.totalorder %s157, %s158
      %p172 = scmp.eq.s32.totalorder %s28, 3
      %p173 = por %p171, %p172
      %p175 = scmp.ne.s32.totalorder %s158, %s174
      %p176 = scmp.eq.s32.totalorder %s28, 0
      %p177 = por %p175, %p176
      %s178 = ssub.s32 %s30, %s37
      %p179 = scmp.eq.s32.totalorder %s178, 0
      %s181 = sadd.s32 %s180, 1
      %s182 = scalar_select %p179, %s180, %s181
      %p185 = pneg %p179
      %p186 = scmp.eq.s32.totalorder %s22, 3
      %p187 = por %p185, %p186
      %p188 = scmp.ne.s32.totalorder %s180, %s183
      %p189 = scmp.eq.s32.totalorder %s22, 0
      %p190 = por %p188, %p189
      %p191 = scmp.ne.s32.totalorder %s180, %s183
      %p192 = scmp.eq.s32.totalorder %s27, 3
      %p193 = por %p191, %p192
      %p194 = scmp.ne.s32.totalorder %s183, %s184
      %p195 = scmp.eq.s32.totalorder %s27, 0
      %p196 = por %p194, %p195
      %p197 = scmp.ne.s32.totalorder %s183, %s184
      %p198 = scmp.eq.s32.totalorder %s28, 3
      %p199 = por %p197, %p198
      %p201 = scmp.ne.s32.totalorder %s184, %s200
      %p202 = scmp.eq.s32.totalorder %s28, 0
      %p203 = por %p201, %p202
      %s204 = ssub.s32 %s29, %s41
      %s205 = ssub.s32 %s30, %s37
      %s206 = sor.u32 %s204, %s205
      %p207 = scmp.eq.s32.totalorder %s206, 0
      %s209 = sadd.s32 %s208, 1
      %s210 = scalar_select %p207, %s208, %s209
      %p213 = pneg %p207
      %p214 = scmp.eq.s32.totalorder %s22, 3
      %p215 = por %p213, %p214
      %p216 = scmp.ne.s32.totalorder %s208, %s211
      %p217 = scmp.eq.s32.totalorder %s22, 0
      %p218 = por %p216, %p217
      %p219 = scmp.ne.s32.totalorder %s208, %s211
      %p220 = scmp.eq.s32.totalorder %s27, 3
      %p221 = por %p219, %p220
      %p222 = scmp.ne.s32.totalorder %s211, %s212
      %p223 = scmp.eq.s32.totalorder %s27, 0
      %p224 = por %p222, %p223
      %p225 = scmp.ne.s32.totalorder %s211, %s212
      %p226 = scmp.eq.s32.totalorder %s28, 3
      %p227 = por %p225, %p226
      %p229 = scmp.ne.s32.totalorder %s212, %s228
      %p230 = scmp.eq.s32.totalorder %s28, 0
      %p231 = por %p229, %p230
      %p232 = scmp.le.s32.totalorder 1, %s22
      %p233 = scmp.lt.s32.totalorder %s22, 5
      %p234 = pnand %p232, %p233
      %p235 = pneg %p234
      // Predicated region
      $region9: #{_mlm_head_forward.1} parent=5 // pred_check
        _
      $region10: #{_mlm_head_forward.1} parent=5 // pred_check_branch
        %237 = sbr.rel (%p234) target = $region12
      $region11: #{_mlm_head_forward.1} parent=5 // pred_region
        %s238 = ssub.s32 %s22, 1
        // Predicated region
        $region13: #{_mlm_head_forward.1} parent=11 // pred_check
          %p239 = pneg %p60
        $region14: #{_mlm_head_forward.1} parent=11 // pred_check_branch
          %241 = sbr.rel (%p239) target = $region16
        $region15: #{_mlm_head_forward.1} parent=11 // pred_region
          %s242 = smul.u32 2, %s31
          %s244 = ssub.s32 256, 256
          %245 = vsyncadd [#allocation4], %s244
          %s246 = smul.addr %s242, 128
          %s247 = scalar_lea.hbm %s0, %s246
          %s248 = sshll.u32 [#allocation3], 4
          %s249 = int_to_ptr.vmem [resolvable:$true] %s248
          %254 = dma.hbm_to_vmem [thread:$0]  %s247, 256, %s249, [#allocation4], 128, 128, 8
        $region16: #{_mlm_head_forward.1} parent=11 // pred_fallthru
          _
        // Predicated region
        $region17: #{_mlm_head_forward.1} parent=11 // pred_check
          %p255 = pneg %p81
        $region18: #{_mlm_head_forward.1} parent=11 // pred_check_branch
          %257 = sbr.rel (%p255) target = $region20
        $region19: #{_mlm_head_forward.1} parent=11 // pred_region
          %s259 = ssub.s32 8192, 8192
          %260 = vsyncadd [#allocation7], %s259
          %s261 = sshll.u32 [#allocation6], 4
          %s262 = int_to_ptr.vmem [resolvable:$true] %s261
          %267 = dma.hbm_to_vmem [thread:$0]  %s1, 8192, %s262, [#allocation7], 512, 512, 32
        $region20: #{_mlm_head_forward.1} parent=11 // pred_fallthru
          _
        // Predicated region
        $region21: #{_mlm_head_forward.1} parent=11 // pred_check
          %p268 = pneg %p102
        $region22: #{_mlm_head_forward.1} parent=11 // pred_check_branch
          %270 = sbr.rel (%p268) target = $region24
        $region23: #{_mlm_head_forward.1} parent=11 // pred_region
          %s272 = ssub.s32 64, 64
          %273 = vsyncadd [#allocation7], %s272
          %s275 = sshll.u32 [#allocation8], 4
          %s276 = int_to_ptr.vmem [resolvable:$true] %s275
          %278 = dma.hbm_to_vmem [thread:$0]  %s2, 64, %s276, [#allocation7]
        $region24: #{_mlm_head_forward.1} parent=11 // pred_fallthru
          _
        // Predicated region
        $region25: #{_mlm_head_forward.1} parent=11 // pred_check
          %p279 = pneg %p123
        $region26: #{_mlm_head_forward.1} parent=11 // pred_check_branch
          %281 = sbr.rel (%p279) target = $region28
        $region27: #{_mlm_head_forward.1} parent=11 // pred_region
          %s283 = ssub.s32 64, 64
          %284 = vsyncadd [#allocation10], %s283
          %s286 = sshll.u32 [#allocation9], 4
          %s287 = int_to_ptr.vmem [resolvable:$true] %s286
          %289 = dma.hbm_to_vmem [thread:$0]  %s3, 64, %s287, [#allocation10]
        $region28: #{_mlm_head_forward.1} parent=11 // pred_fallthru
          _
        // Predicated region
        $region29: #{_mlm_head_forward.1} parent=11 // pred_check
          %p290 = pneg %p144
        $region30: #{_mlm_head_forward.1} parent=11 // pred_check_branch
          %292 = sbr.rel (%p290) target = $region32
        $region31: #{_mlm_head_forward.1} parent=11 // pred_region
          %s294 = ssub.s32 64, 64
          %295 = vsyncadd [#allocation10], %s294
          %s297 = sshll.u32 [#allocation11], 4
          %s298 = int_to_ptr.vmem [resolvable:$true] %s297
          %300 = dma.hbm_to_vmem [thread:$0]  %s4, 64, %s298, [#allocation10]
        $region32: #{_mlm_head_forward.1} parent=11 // pred_fallthru
          _
      $region12: #{_mlm_head_forward.1} parent=5 // pred_fallthru
        _
      %p301 = scmp.lt.s32.totalorder %s22, 4
      // Predicated region
      $region33: #{_mlm_head_forward.1} parent=5 // pred_check
        %p302 = pneg %p301
      $region34: #{_mlm_head_forward.1} parent=5 // pred_check_branch
        %304 = sbr.rel (%p302) target = $region36
      $region35: #{_mlm_head_forward.1} parent=5 // pred_region
        // Predicated region
        $region37: #{_mlm_head_forward.1} parent=35 // pred_check
          %p305 = pneg %p164
        $region38: #{_mlm_head_forward.1} parent=35 // pred_check_branch
          %307 = sbr.rel (%p305) target = $region40
        $region39: #{_mlm_head_forward.1} parent=35 // pred_region
          %s308 = sand.u32 %s22, 1
          %s309 = scalar_lea.sflag [#allocation13], %s308
          %s310 = sand.u32 %s154, 1
          %s311 = smul.addr %s310, 1024
          %s312 = scalar_lea.vmem [#allocation12], %s311
          %s313 = smul.u32 2, %s30
          %s315 = ssub.s32 16384, 16384
          %316 = vsyncadd %s309, %s315
          %s317 = smul.addr %s313, 128
          %s318 = scalar_lea.hbm %s5, %s317
          %s319 = sshll.u32 %s312, 4
          %s320 = int_to_ptr.vmem [resolvable:$true] %s319
          %325 = dma.hbm_to_vmem [thread:$0]  %s318, 16384, %s320, %s309, 1024, 256, 16
        $region40: #{_mlm_head_forward.1} parent=35 // pred_fallthru
          _
        // Predicated region
        $region41: #{_mlm_head_forward.1} parent=35 // pred_check
          %p326 = pneg %p190
        $region42: #{_mlm_head_forward.1} parent=35 // pred_check_branch
          %328 = sbr.rel (%p326) target = $region44
        $region43: #{_mlm_head_forward.1} parent=35 // pred_region
          %s329 = sand.u32 %s22, 1
          %s330 = scalar_lea.sflag [#allocation13], %s329
          %s331 = sand.u32 %s180, 1
          %s332 = smul.addr %s331, 2
          %s333 = scalar_lea.vmem [#allocation14], %s332
          %s334 = smul.u32 2, %s30
          %s336 = ssub.s32 32, 32
          %337 = vsyncadd %s330, %s336
          %s338 = smul.addr %s334, 16
          %s339 = scalar_lea.hbm %s6, %s338
          %s341 = sshll.u32 %s333, 4
          %s342 = int_to_ptr.vmem [resolvable:$true] %s341
          %344 = dma.hbm_to_vmem [thread:$0]  %s339, 32, %s342, %s330
        $region44: #{_mlm_head_forward.1} parent=35 // pred_fallthru
          _
      $region36: #{_mlm_head_forward.1} parent=5 // pred_fallthru
        _
      %p345 = scmp.le.s32.totalorder 1, %s22
      %p346 = scmp.lt.s32.totalorder %s22, 5
      %p347 = pnand %p345, %p346
      %p348 = pneg %p347
      // Predicated region
      $region45: #{_mlm_head_forward.1} parent=5 // pred_check
        _
      $region46: #{_mlm_head_forward.1} parent=5 // pred_check_branch
        %350 = sbr.rel (%p347) target = $region48
      $region47: #{_mlm_head_forward.1} parent=5 // pred_region
        %s351 = ssub.s32 %s22, 1
        // Predicated region
        $region49: #{_mlm_head_forward.1} parent=47 // pred_check
          %p352 = pneg %p60
        $region50: #{_mlm_head_forward.1} parent=47 // pred_check_branch
          %354 = sbr.rel (%p352) target = $region52
        $region51: #{_mlm_head_forward.1} parent=47 // pred_region
          %355 = dma.done [#allocation4], 256
        $region52: #{_mlm_head_forward.1} parent=47 // pred_fallthru
          _
        // Predicated region
        $region53: #{_mlm_head_forward.1} parent=47 // pred_check
          %p356 = pneg %p81
        $region54: #{_mlm_head_forward.1} parent=47 // pred_check_branch
          %358 = sbr.rel (%p356) target = $region56
        $region55: #{_mlm_head_forward.1} parent=47 // pred_region
          %359 = dma.done [#allocation7], 8192
        $region56: #{_mlm_head_forward.1} parent=47 // pred_fallthru
          _
        // Predicated region
        $region57: #{_mlm_head_forward.1} parent=47 // pred_check
          %p360 = pneg %p102
        $region58: #{_mlm_head_forward.1} parent=47 // pred_check_branch
          %362 = sbr.rel (%p360) target = $region60
        $region59: #{_mlm_head_forward.1} parent=47 // pred_region
          %363 = dma.done [#allocation7], 64
        $region60: #{_mlm_head_forward.1} parent=47 // pred_fallthru
          _
        // Predicated region
        $region61: #{_mlm_head_forward.1} parent=47 // pred_check
          %p364 = pneg %p123
        $region62: #{_mlm_head_forward.1} parent=47 // pred_check_branch
          %366 = sbr.rel (%p364) target = $region64
        $region63: #{_mlm_head_forward.1} parent=47 // pred_region
          %367 = dma.done [#allocation10], 64
        $region64: #{_mlm_head_forward.1} parent=47 // pred_fallthru
          _
        // Predicated region
        $region65: #{_mlm_head_forward.1} parent=47 // pred_check
          %p368 = pneg %p144
        $region66: #{_mlm_head_forward.1} parent=47 // pred_check_branch
          %370 = sbr.rel (%p368) target = $region68
        $region67: #{_mlm_head_forward.1} parent=47 // pred_region
          %371 = dma.done [#allocation10], 64
        $region68: #{_mlm_head_forward.1} parent=47 // pred_fallthru
          _
        %s372 = sand.u32 %s27, 1
        %s373 = scalar_lea.sflag [#allocation13], %s372
        %s374 = sand.u32 %s157, 1
        %s375 = smul.addr %s374, 1024
        %s376 = scalar_lea.vmem [#allocation12], %s375
        // Predicated region
        $region69: #{_mlm_head_forward.1} parent=47 // pred_check
          %p377 = pneg %p170
        $region70: #{_mlm_head_forward.1} parent=47 // pred_check_branch
          %379 = sbr.rel (%p377) target = $region72
        $region71: #{_mlm_head_forward.1} parent=47 // pred_region
          %380 = dma.done %s373, 16384
        $region72: #{_mlm_head_forward.1} parent=47 // pred_fallthru
          _
        %s381 = sand.u32 %s27, 1
        %s382 = scalar_lea.sflag [#allocation13], %s381
        %s383 = sand.u32 %s183, 1
        %s384 = smul.addr %s383, 2
        %s385 = scalar_lea.vmem [#allocation14], %s384
        // Predicated region
        $region73: #{_mlm_head_forward.1} parent=47 // pred_check
          %p386 = pneg %p196
        $region74: #{_mlm_head_forward.1} parent=47 // pred_check_branch
          %388 = sbr.rel (%p386) target = $region76
        $region75: #{_mlm_head_forward.1} parent=47 // pred_region
          %389 = dma.done %s382, 32
        $region76: #{_mlm_head_forward.1} parent=47 // pred_fallthru
          _
        %p390 = pneg %p60
        %p391 = pneg %p57
        %p392 = pneg %p81
        %p393 = pneg %p78
        %p394 = pneg %p102
        %p395 = pneg %p99
        %p396 = pneg %p123
        %p397 = pneg %p120
        %p398 = pneg %p144
        %p399 = pneg %p141
        %s400 = sand.u32 %s27, 1
        %s401 = scalar_lea.sflag [#allocation13], %s400
        %s402 = sand.u32 %s157, 1
        %s403 = smul.addr %s402, 1024
        %s404 = scalar_lea.vmem [#allocation12], %s403
        %p405 = pneg %p170
        %p406 = pneg %p167
        %s407 = sand.u32 %s27, 1
        %s408 = scalar_lea.sflag [#allocation13], %s407
        %s409 = sand.u32 %s183, 1
        %s410 = smul.addr %s409, 2
        %s411 = scalar_lea.vmem [#allocation14], %s410
        %p412 = pneg %p196
        %p413 = pneg %p193
        %p414 = pneg %p224
        %p415 = pneg %p221
        %s416 = sand.u32 %s211, 1
        %s417 = scalar_lea.sflag [#allocation5], %s416
        %s418 = sand.u32 %s211, 1
        %s419 = smul.addr %s418, 32
        %s420 = scalar_lea.vmem [#allocation15], %s419
        %s421 = smul.u32 2, %s31
        %s422 = smul.u32 2, %s32
        %s423 = smul.u32 2, %s32
        %s424 = smul.u32 2, %s31
        %s425 = smul.u32 2, %s32
        %p426 = scmp.eq.s32.totalorder %s32, 0
        // Predicated region
        $region77: #{_mlm_head_forward.1} parent=47 // pred_check
          %p427 = pneg %p426
        $region78: #{_mlm_head_forward.1} parent=47 // pred_check_branch
          %429 = sbr.rel (%p427) target = $region80
        $region79: #{_mlm_head_forward.1} parent=47 // pred_region
          %v430 = vld [vmem:[#allocation3] sm:$0xff]
          %v431 = vld [vmem:[#allocation3 + $0x8] sm:$0xff]
          %v432 = vld [vmem:[#allocation6] sm:$0xff]
          %v433 = vld [vmem:[#allocation6 + $0x8] sm:$0xff]
          %v434 = vld [vmem:[#allocation6 + $0x10] sm:$0xff]
          %v435 = vld [vmem:[#allocation6 + $0x18] sm:$0xff]
          %v436 = vld [vmem:[#allocation6 + $0x20] sm:$0xff]
          %v437 = vld [vmem:[#allocation6 + $0x28] sm:$0xff]
          %v438 = vld [vmem:[#allocation6 + $0x30] sm:$0xff]
          %v439 = vld [vmem:[#allocation6 + $0x38] sm:$0xff]
          %v440 = vld [vmem:[#allocation6 + $0x40] sm:$0xff]
          %v441 = vld [vmem:[#allocation6 + $0x48] sm:$0xff]
          %v442 = vld [vmem:[#allocation6 + $0x50] sm:$0xff]
          %v443 = vld [vmem:[#allocation6 + $0x58] sm:$0xff]
          %v444 = vld [vmem:[#allocation6 + $0x60] sm:$0xff]
          %v445 = vld [vmem:[#allocation6 + $0x68] sm:$0xff]
          %v446 = vld [vmem:[#allocation6 + $0x70] sm:$0xff]
          %v447 = vld [vmem:[#allocation6 + $0x78] sm:$0xff]
          %v448 = vld [vmem:[#allocation6 + $0x80] sm:$0xff]
          %v449 = vld [vmem:[#allocation6 + $0x88] sm:$0xff]
          %v450 = vld [vmem:[#allocation6 + $0x90] sm:$0xff]
          %v451 = vld [vmem:[#allocation6 + $0x98] sm:$0xff]
          %v452 = vld [vmem:[#allocation6 + $0xa0] sm:$0xff]
          %v453 = vld [vmem:[#allocation6 + $0xa8] sm:$0xff]
          %v454 = vld [vmem:[#allocation6 + $0xb0] sm:$0xff]
          %v455 = vld [vmem:[#allocation6 + $0xb8] sm:$0xff]
          %v456 = vld [vmem:[#allocation6 + $0xc0] sm:$0xff]
          %v457 = vld [vmem:[#allocation6 + $0xc8] sm:$0xff]
          %v458 = vld [vmem:[#allocation6 + $0xd0] sm:$0xff]
          %v459 = vld [vmem:[#allocation6 + $0xd8] sm:$0xff]
          %v460 = vld [vmem:[#allocation6 + $0xe0] sm:$0xff]
          %v461 = vld [vmem:[#allocation6 + $0xe8] sm:$0xff]
          %v462 = vld [vmem:[#allocation6 + $0xf0] sm:$0xff]
          %v463 = vld [vmem:[#allocation6 + $0xf8] sm:$0xff]
          %v464 = vld [vmem:[#allocation6 + $0x100] sm:$0xff]
          %v465 = vld [vmem:[#allocation6 + $0x108] sm:$0xff]
          %v466 = vld [vmem:[#allocation6 + $0x110] sm:$0xff]
          %v467 = vld [vmem:[#allocation6 + $0x118] sm:$0xff]
          %v468 = vld [vmem:[#allocation6 + $0x120] sm:$0xff]
          %v469 = vld [vmem:[#allocation6 + $0x128] sm:$0xff]
          %v470 = vld [vmem:[#allocation6 + $0x130] sm:$0xff]
          %v471 = vld [vmem:[#allocation6 + $0x138] sm:$0xff]
          %v472 = vld [vmem:[#allocation6 + $0x140] sm:$0xff]
          %v473 = vld [vmem:[#allocation6 + $0x148] sm:$0xff]
          %v474 = vld [vmem:[#allocation6 + $0x150] sm:$0xff]
          %v475 = vld [vmem:[#allocation6 + $0x158] sm:$0xff]
          %v476 = vld [vmem:[#allocation6 + $0x160] sm:$0xff]
          %v477 = vld [vmem:[#allocation6 + $0x168] sm:$0xff]
          %v478 = vld [vmem:[#allocation6 + $0x170] sm:$0xff]
          %v479 = vld [vmem:[#allocation6 + $0x178] sm:$0xff]
          %v480 = vld [vmem:[#allocation6 + $0x180] sm:$0xff]
          %v481 = vld [vmem:[#allocation6 + $0x188] sm:$0xff]
          %v482 = vld [vmem:[#allocation6 + $0x190] sm:$0xff]
          %v483 = vld [vmem:[#allocation6 + $0x198] sm:$0xff]
          %v484 = vld [vmem:[#allocation6 + $0x1a0] sm:$0xff]
          %v485 = vld [vmem:[#allocation6 + $0x1a8] sm:$0xff]
          %v486 = vld [vmem:[#allocation6 + $0x1b0] sm:$0xff]
          %v487 = vld [vmem:[#allocation6 + $0x1b8] sm:$0xff]
          %v488 = vld [vmem:[#allocation6 + $0x1c0] sm:$0xff]
          %v489 = vld [vmem:[#allocation6 + $0x1c8] sm:$0xff]
          %v490 = vld [vmem:[#allocation6 + $0x1d0] sm:$0xff]
          %v491 = vld [vmem:[#allocation6 + $0x1d8] sm:$0xff]
          %v492 = vld [vmem:[#allocation6 + $0x1e0] sm:$0xff]
          %v493 = vld [vmem:[#allocation6 + $0x1e8] sm:$0xff]
          %v494 = vld [vmem:[#allocation6 + $0x1f0] sm:$0xff]
          %v495 = vld [vmem:[#allocation6 + $0x1f8] sm:$0xff]
          %v496 = vld [vmem:[#allocation8] sm:$0xf]
          %v498 = vlaneseq
          %v499 = vshrl.u32 %v498, 7
          %v500 = vsub.s32 0, %v499
          %v501 = vrot.slane %v496, %v500
          %v502 = vlaneseq
          %v503 = vshrl.u32 %v502, 7
          %v504 = vsub.s32 1, %v503
          %v505 = vrot.slane %v496, %v504
          %v506 = vlaneseq
          %v507 = vshrl.u32 %v506, 7
          %v508 = vsub.s32 2, %v507
          %v509 = vrot.slane %v496, %v508
          %v510 = vlaneseq
          %v511 = vshrl.u32 %v510, 7
          %v512 = vsub.s32 3, %v511
          %v513 = vrot.slane %v496, %v512
          %518 = vmatprep.subr.mxu0 %v493
          %519 = vmatpush1.msra.mxu0 %v492
          %520 = vmatprep.subr.mxu0 %v489
          %521 = vmatpush1.msra.mxu0 %v488
          %522 = vmatprep.subr.mxu0 %v485
          %523 = vmatpush1.msra.mxu0 %v484
          %524 = vmatprep.subr.mxu0 %v481
          %525 = vmatpush1.msra.mxu0 %v480
          %526 = vmatprep.subr.mxu0 %v477
          %527 = vmatpush1.msra.mxu0 %v476
          %528 = vmatprep.subr.mxu0 %v473
          %529 = vmatpush1.msra.mxu0 %v472
          %530 = vmatprep.subr.mxu0 %v469
          %531 = vmatpush1.msra.mxu0 %v468
          %532 = vmatprep.subr.mxu0 %v465
          %533 = vmatpush1.msra.mxu0 %v464
          %534 = vmatprep.subr.mxu0 %v461
          %535 = vmatpush1.msra.mxu0 %v460
          %536 = vmatprep.subr.mxu0 %v457
          %537 = vmatpush1.msra.mxu0 %v456
          %538 = vmatprep.subr.mxu0 %v453
          %539 = vmatpush1.msra.mxu0 %v452
          %540 = vmatprep.subr.mxu0 %v449
          %541 = vmatpush1.msra.mxu0 %v448
          %542 = vmatprep.subr.mxu0 %v445
          %543 = vmatpush1.msra.mxu0 %v444
          %544 = vmatprep.subr.mxu0 %v441
          %545 = vmatpush1.msra.mxu0 %v440
          %546 = vmatprep.subr.mxu0 %v437
          %547 = vmatpush1.msra.mxu0 %v436
          %548 = vmatprep.subr.mxu0 %v433
          %549 = vmatpush1.msra.mxu0 %v432
          %550 = vmatprep.subr.mxu0 0.0
          %551 = vmatpush2.msra.mxu0 0.0
          %552 = vmatprep.subr.mxu0 0.0
          %553 = vmatpush2.msra.mxu0 0.0
          %554 = vmatprep.subr.mxu0 0.0
          %555 = vmatpush2.msra.mxu0 0.0
          %556 = vmatprep.subr.mxu0 0.0
          %557 = vmatpush2.msra.mxu0 0.0
          %558 = vmatprep.subr.mxu0 0.0
          %559 = vmatpush2.msra.mxu0 0.0
          %560 = vmatprep.subr.mxu0 0.0
          %561 = vmatpush2.msra.mxu0 0.0
          %562 = vmatprep.subr.mxu0 0.0
          %563 = vmatpush2.msra.mxu0 0.0
          %564 = vmatprep.subr.mxu0 0.0
          %565 = vmatpush2.msra.mxu0 0.0
          %566 = vmatprep.subr.mxu0 0.0
          %567 = vmatpush2.msra.mxu0 0.0
          %568 = vmatprep.subr.mxu0 0.0
          %569 = vmatpush2.msra.mxu0 0.0
          %570 = vmatprep.subr.mxu0 0.0
          %571 = vmatpush2.msra.mxu0 0.0
          %572 = vmatprep.subr.mxu0 0.0
          %573 = vmatpush2.msra.mxu0 0.0
          %574 = vmatprep.subr.mxu0 0.0
          %575 = vmatpush2.msra.mxu0 0.0
          %576 = vmatprep.subr.mxu0 0.0
          %577 = vmatpush2.msra.mxu0 0.0
          %578 = vmatprep.subr.mxu0 0.0
          %579 = vmatpush2.msra.mxu0 0.0
          %580 = vmatprep.subr.mxu0 0.0
          %581 = vmatpush2.msra.mxu0 0.0
          %582 = vmatprep.mubr.f32.mxu0 0.0
          %583 = vmatmul.mubr.f32.gmra.mxu0 %v430
          %v584 = vpop.f32.mrf.mxu0
          %v585 = vadd.f32 %v501, %v584
          %v586 = vpop.f32.mrf.mxu0
          %v587 = vadd.f32 %v505, %v586
          %588 = vmatprep.mubr.f32.mxu0 0.0
          %589 = vmatmul.mubr.f32.gmra.mxu0 %v431
          %v590 = vpop.f32.mrf.mxu0
          %v591 = vadd.f32 %v501, %v590
          %v592 = vpop.f32.mrf.mxu0
          %v593 = vadd.f32 %v505, %v592
          %594 = vdwg.mxu0
          %595 = vmatprep.subr.mxu0 %v495
          %596 = vmatpush1.msra.mxu0 %v494
          %597 = vmatprep.subr.mxu0 %v491
          %598 = vmatpush1.msra.mxu0 %v490
          %599 = vmatprep.subr.mxu0 %v487
          %600 = vmatpush1.msra.mxu0 %v486
          %601 = vmatprep.subr.mxu0 %v483
          %602 = vmatpush1.msra.mxu0 %v482
          %603 = vmatprep.subr.mxu0 %v479
          %604 = vmatpush1.msra.mxu0 %v478
          %605 = vmatprep.subr.mxu0 %v475
          %606 = vmatpush1.msra.mxu0 %v474
          %607 = vmatprep.subr.mxu0 %v471
          %608 = vmatpush1.msra.mxu0 %v470
          %609 = vmatprep.subr.mxu0 %v467
          %610 = vmatpush1.msra.mxu0 %v466
          %611 = vmatprep.subr.mxu0 %v463
          %612 = vmatpush1.msra.mxu0 %v462
          %613 = vmatprep.subr.mxu0 %v459
          %614 = vmatpush1.msra.mxu0 %v458
          %615 = vmatprep.subr.mxu0 %v455
          %616 = vmatpush1.msra.mxu0 %v454
          %617 = vmatprep.subr.mxu0 %v451
          %618 = vmatpush1.msra.mxu0 %v450
          %619 = vmatprep.subr.mxu0 %v447
          %620 = vmatpush1.msra.mxu0 %v446
          %621 = vmatprep.subr.mxu0 %v443
          %622 = vmatpush1.msra.mxu0 %v442
          %623 = vmatprep.subr.mxu0 %v439
          %624 = vmatpush1.msra.mxu0 %v438
          %625 = vmatprep.subr.mxu0 %v435
          %626 = vmatpush1.msra.mxu0 %v434
          %627 = vmatprep.subr.mxu0 0.0
          %628 = vmatpush2.msra.mxu0 0.0
          %629 = vmatprep.subr.mxu0 0.0
          %630 = vmatpush2.msra.mxu0 0.0
          %631 = vmatprep.subr.mxu0 0.0
          %632 = vmatpush2.msra.mxu0 0.0
          %633 = vmatprep.subr.mxu0 0.0
          %634 = vmatpush2.msra.mxu0 0.0
          %635 = vmatprep.subr.mxu0 0.0
          %636 = vmatpush2.msra.mxu0 0.0
          %637 = vmatprep.subr.mxu0 0.0
          %638 = vmatpush2.msra.mxu0 0.0
          %639 = vmatprep.subr.mxu0 0.0
          %640 = vmatpush2.msra.mxu0 0.0
          %641 = vmatprep.subr.mxu0 0.0
          %642 = vmatpush2.msra.mxu0 0.0
          %643 = vmatprep.subr.mxu0 0.0
          %644 = vmatpush2.msra.mxu0 0.0
          %645 = vmatprep.subr.mxu0 0.0
          %646 = vmatpush2.msra.mxu0 0.0
          %647 = vmatprep.subr.mxu0 0.0
          %648 = vmatpush2.msra.mxu0 0.0
          %649 = vmatprep.subr.mxu0 0.0
          %650 = vmatpush2.msra.mxu0 0.0
          %651 = vmatprep.subr.mxu0 0.0
          %652 = vmatpush2.msra.mxu0 0.0
          %653 = vmatprep.subr.mxu0 0.0
          %654 = vmatpush2.msra.mxu0 0.0
          %655 = vmatprep.subr.mxu0 0.0
          %656 = vmatpush2.msra.mxu0 0.0
          %657 = vmatprep.subr.mxu0 0.0
          %658 = vmatpush2.msra.mxu0 0.0
          %659 = vmatprep.mubr.f32.mxu0 0.0
          %660 = vmatmul.mubr.f32.gmra.mxu0 %v430
          %v661 = vpop.f32.mrf.mxu0
          %v662 = vadd.f32 %v509, %v661
          %v663 = vpop.f32.mrf.mxu0
          %v664 = vadd.f32 %v513, %v663
          %665 = vmatprep.mubr.f32.mxu0 0.0
          %666 = vmatmul.mubr.f32.gmra.mxu0 %v431
          %v667 = vpop.f32.mrf.mxu0
          %v668 = vadd.f32 %v509, %v667
          %v669 = vpop.f32.mrf.mxu0
          %v670 = vadd.f32 %v513, %v669
          %671 = vdwg.mxu0
          %v672 = vmul.f32 %v585, 0.5
          %v673 = vmul.f32 %v587, 0.5
          %v674 = vmul.f32 %v662, 0.5
          %v675 = vmul.f32 %v664, 0.5
          %v676 = vmul.f32 %v591, 0.5
          %v677 = vmul.f32 %v593, 0.5
          %v678 = vmul.f32 %v668, 0.5
          %v679 = vmul.f32 %v670, 0.5
          %v680 = vrcp.pop 1.4142135
          %v681 = vmul.f32 %v585, %v680
          %v682 = vmul.f32 %v587, %v680
          %v683 = vmul.f32 %v662, %v680
          %v684 = vmul.f32 %v664, %v680
          %v685 = vmul.f32 %v591, %v680
          %v686 = vmul.f32 %v593, %v680
          %v687 = vmul.f32 %v668, %v680
          %v688 = vmul.f32 %v670, %v680
          %v689 = verf.f32.pop %v681
          %v690 = verf.f32.pop %v682
          %v691 = verf.f32.pop %v683
          %v692 = verf.f32.pop %v684
          %v693 = verf.f32.pop %v685
          %v694 = verf.f32.pop %v686
          %v695 = verf.f32.pop %v687
          %v696 = verf.f32.pop %v688
          %v697 = vadd.f32 %v689, 1.0
          %v698 = vadd.f32 %v690, 1.0
          %v699 = vadd.f32 %v691, 1.0
          %v700 = vadd.f32 %v692, 1.0
          %v701 = vadd.f32 %v693, 1.0
          %v702 = vadd.f32 %v694, 1.0
          %v703 = vadd.f32 %v695, 1.0
          %v704 = vadd.f32 %v696, 1.0
          %v705 = vmul.f32 %v672, %v697
          %v706 = vmul.f32 %v673, %v698
          %v707 = vmul.f32 %v674, %v699
          %v708 = vmul.f32 %v675, %v700
          %v709 = vmul.f32 %v676, %v701
          %v710 = vmul.f32 %v677, %v702
          %v711 = vmul.f32 %v678, %v703
          %v712 = vmul.f32 %v679, %v704
          %v713 = vadd.f32 %v705, %v706
          %v714 = vadd.f32 %v713, %v707
          %v715 = vadd.f32 %v714, %v708
          %716 = vadd.xlane.f32.xlu0 %v715
          %v717 = vpop.xlane.xlu0 %716
          %v718 = vadd.f32 %v709, %v710
          %v719 = vadd.f32 %v718, %v711
          %v720 = vadd.f32 %v719, %v712
          %721 = vadd.xlane.f32.xlu0 %v720
          %v722 = vpop.xlane.xlu0 %721
          %v723 = vmul.f32 %v717, 0.001953125
          %v724 = vmul.f32 %v722, 0.001953125
          %v725 = vsub.f32 %v705, %v723
          %v726 = vsub.f32 %v706, %v723
          %v727 = vsub.f32 %v707, %v723
          %v728 = vsub.f32 %v708, %v723
          %v729 = vsub.f32 %v709, %v724
          %v730 = vsub.f32 %v710, %v724
          %v731 = vsub.f32 %v711, %v724
          %v732 = vsub.f32 %v712, %v724
          %v733 = vmul.f32 %v725, %v725
          %v734 = vmul.f32 %v726, %v726
          %v735 = vmul.f32 %v727, %v727
          %v736 = vmul.f32 %v728, %v728
          %v737 = vmul.f32 %v729, %v729
          %v738 = vmul.f32 %v730, %v730
          %v739 = vmul.f32 %v731, %v731
          %v740 = vmul.f32 %v732, %v732
          %v741 = vadd.f32 %v733, %v734
          %v742 = vadd.f32 %v741, %v735
          %v743 = vadd.f32 %v742, %v736
          %744 = vadd.xlane.f32.xlu0 %v743
          %v745 = vpop.xlane.xlu0 %744
          %v746 = vadd.f32 %v737, %v738
          %v747 = vadd.f32 %v746, %v739
          %v748 = vadd.f32 %v747, %v740
          %749 = vadd.xlane.f32.xlu0 %v748
          %v750 = vpop.xlane.xlu0 %749
          %v751 = vmul.f32 %v745, 0.001953125
          %v752 = vmul.f32 %v750, 0.001953125
          %v753 = vadd.f32 %v751, 1e-12
          %v754 = vadd.f32 %v752, 1e-12
          %v755 = vrsqrt.pop %v753
          %v756 = vrsqrt.pop %v754
          %v757 = vmul.f32 %v725, %v755
          %v758 = vmul.f32 %v726, %v755
          %v759 = vmul.f32 %v727, %v755
          %v760 = vmul.f32 %v728, %v755
          %v761 = vmul.f32 %v729, %v756
          %v762 = vmul.f32 %v730, %v756
          %v763 = vmul.f32 %v731, %v756
          %v764 = vmul.f32 %v732, %v756
          %v765 = vld [vmem:[#allocation9] sm:$0xf]
          %v767 = vlaneseq
          %v768 = vshrl.u32 %v767, 7
          %v769 = vsub.s32 0, %v768
          %v770 = vrot.slane %v765, %v769
          %v771 = vlaneseq
          %v772 = vshrl.u32 %v771, 7
          %v773 = vsub.s32 1, %v772
          %v774 = vrot.slane %v765, %v773
          %v775 = vlaneseq
          %v776 = vshrl.u32 %v775, 7
          %v777 = vsub.s32 2, %v776
          %v778 = vrot.slane %v765, %v777
          %v779 = vlaneseq
          %v780 = vshrl.u32 %v779, 7
          %v781 = vsub.s32 3, %v780
          %v782 = vrot.slane %v765, %v781
          %v787 = vmul.f32 %v757, %v770
          %v788 = vmul.f32 %v758, %v774
          %v789 = vmul.f32 %v759, %v778
          %v790 = vmul.f32 %v760, %v782
          %v791 = vmul.f32 %v761, %v770
          %v792 = vmul.f32 %v762, %v774
          %v793 = vmul.f32 %v763, %v778
          %v794 = vmul.f32 %v764, %v782
          %v795 = vld [vmem:[#allocation11] sm:$0xf]
          %v797 = vlaneseq
          %v798 = vshrl.u32 %v797, 7
          %v799 = vsub.s32 0, %v798
          %v800 = vrot.slane %v795, %v799
          %v801 = vlaneseq
          %v802 = vshrl.u32 %v801, 7
          %v803 = vsub.s32 1, %v802
          %v804 = vrot.slane %v795, %v803
          %v805 = vlaneseq
          %v806 = vshrl.u32 %v805, 7
          %v807 = vsub.s32 2, %v806
          %v808 = vrot.slane %v795, %v807
          %v809 = vlaneseq
          %v810 = vshrl.u32 %v809, 7
          %v811 = vsub.s32 3, %v810
          %v812 = vrot.slane %v795, %v811
          %v817 = vadd.f32 %v787, %v800
          %v818 = vadd.f32 %v788, %v804
          %v819 = vadd.f32 %v789, %v808
          %v820 = vadd.f32 %v790, %v812
          %v821 = vadd.f32 %v791, %v800
          %v822 = vadd.f32 %v792, %v804
          %v823 = vadd.f32 %v793, %v808
          %v824 = vadd.f32 %v794, %v812
          %825 = vst [vmem:[#allocation2] sm:$0xff] %v817
          %826 = vst [vmem:[#allocation2 + $0x8] sm:$0xff] %v818
          %827 = vst [vmem:[#allocation2 + $0x10] sm:$0xff] %v819
          %828 = vst [vmem:[#allocation2 + $0x18] sm:$0xff] %v820
          %829 = vst [vmem:[#allocation2 + $0x20] sm:$0xff] %v821
          %830 = vst [vmem:[#allocation2 + $0x28] sm:$0xff] %v822
          %831 = vst [vmem:[#allocation2 + $0x30] sm:$0xff] %v823
          %832 = vst [vmem:[#allocation2 + $0x38] sm:$0xff] %v824
        $region80: #{_mlm_head_forward.1} parent=47 // pred_fallthru
          _
        %v833 = vld [vmem:[#allocation2] sm:$0xff]
        %v834 = vld [vmem:[#allocation2 + $0x8] sm:$0xff]
        %v835 = vld [vmem:[#allocation2 + $0x10] sm:$0xff]
        %v836 = vld [vmem:[#allocation2 + $0x18] sm:$0xff]
        %v837 = vld [vmem:[#allocation2 + $0x20] sm:$0xff]
        %v838 = vld [vmem:[#allocation2 + $0x28] sm:$0xff]
        %v839 = vld [vmem:[#allocation2 + $0x30] sm:$0xff]
        %v840 = vld [vmem:[#allocation2 + $0x38] sm:$0xff]
        %v841 = vld [vmem:[%s376] sm:$0xff]
        %v842 = vld [vmem:[%s376 + $0x8] sm:$0xff]
        %v843 = vld [vmem:[%s376 + $0x10] sm:$0xff]
        %v844 = vld [vmem:[%s376 + $0x18] sm:$0xff]
        %v845 = vld [vmem:[%s376 + $0x20] sm:$0xff]
        %v846 = vld [vmem:[%s376 + $0x28] sm:$0xff]
        %v847 = vld [vmem:[%s376 + $0x30] sm:$0xff]
        %v848 = vld [vmem:[%s376 + $0x38] sm:$0xff]
        %v849 = vld [vmem:[%s376 + $0x40] sm:$0xff]
        %v850 = vld [vmem:[%s376 + $0x48] sm:$0xff]
        %v851 = vld [vmem:[%s376 + $0x50] sm:$0xff]
        %v852 = vld [vmem:[%s376 + $0x58] sm:$0xff]
        %v853 = vld [vmem:[%s376 + $0x60] sm:$0xff]
        %v854 = vld [vmem:[%s376 + $0x68] sm:$0xff]
        %v855 = vld [vmem:[%s376 + $0x70] sm:$0xff]
        %v856 = vld [vmem:[%s376 + $0x78] sm:$0xff]
        %v857 = vld [vmem:[%s376 + $0x80] sm:$0xff]
        %v858 = vld [vmem:[%s376 + $0x88] sm:$0xff]
        %v859 = vld [vmem:[%s376 + $0x90] sm:$0xff]
        %v860 = vld [vmem:[%s376 + $0x98] sm:$0xff]
        %v861 = vld [vmem:[%s376 + $0xa0] sm:$0xff]
        %v862 = vld [vmem:[%s376 + $0xa8] sm:$0xff]
        %v863 = vld [vmem:[%s376 + $0xb0] sm:$0xff]
        %v864 = vld [vmem:[%s376 + $0xb8] sm:$0xff]
        %v865 = vld [vmem:[%s376 + $0xc0] sm:$0xff]
        %v866 = vld [vmem:[%s376 + $0xc8] sm:$0xff]
        %v867 = vld [vmem:[%s376 + $0xd0] sm:$0xff]
        %v868 = vld [vmem:[%s376 + $0xd8] sm:$0xff]
        %v869 = vld [vmem:[%s376 + $0xe0] sm:$0xff]
        %v870 = vld [vmem:[%s376 + $0xe8] sm:$0xff]
        %v871 = vld [vmem:[%s376 + $0xf0] sm:$0xff]
        %v872 = vld [vmem:[%s376 + $0xf8] sm:$0xff]
        %v873 = vld [vmem:[%s376 + $0x100] sm:$0xff]
        %v874 = vld [vmem:[%s376 + $0x108] sm:$0xff]
        %v875 = vld [vmem:[%s376 + $0x110] sm:$0xff]
        %v876 = vld [vmem:[%s376 + $0x118] sm:$0xff]
        %v877 = vld [vmem:[%s376 + $0x120] sm:$0xff]
        %v878 = vld [vmem:[%s376 + $0x128] sm:$0xff]
        %v879 = vld [vmem:[%s376 + $0x130] sm:$0xff]
        %v880 = vld [vmem:[%s376 + $0x138] sm:$0xff]
        %v881 = vld [vmem:[%s376 + $0x140] sm:$0xff]
        %v882 = vld [vmem:[%s376 + $0x148] sm:$0xff]
        %v883 = vld [vmem:[%s376 + $0x150] sm:$0xff]
        %v884 = vld [vmem:[%s376 + $0x158] sm:$0xff]
        %v885 = vld [vmem:[%s376 + $0x160] sm:$0xff]
        %v886 = vld [vmem:[%s376 + $0x168] sm:$0xff]
        %v887 = vld [vmem:[%s376 + $0x170] sm:$0xff]
        %v888 = vld [vmem:[%s376 + $0x178] sm:$0xff]
        %v889 = vld [vmem:[%s376 + $0x180] sm:$0xff]
        %v890 = vld [vmem:[%s376 + $0x188] sm:$0xff]
        %v891 = vld [vmem:[%s376 + $0x190] sm:$0xff]
        %v892 = vld [vmem:[%s376 + $0x198] sm:$0xff]
        %v893 = vld [vmem:[%s376 + $0x1a0] sm:$0xff]
        %v894 = vld [vmem:[%s376 + $0x1a8] sm:$0xff]
        %v895 = vld [vmem:[%s376 + $0x1b0] sm:$0xff]
        %v896 = vld [vmem:[%s376 + $0x1b8] sm:$0xff]
        %v897 = vld [vmem:[%s376 + $0x1c0] sm:$0xff]
        %v898 = vld [vmem:[%s376 + $0x1c8] sm:$0xff]
        %v899 = vld [vmem:[%s376 + $0x1d0] sm:$0xff]
        %v900 = vld [vmem:[%s376 + $0x1d8] sm:$0xff]
        %v901 = vld [vmem:[%s376 + $0x1e0] sm:$0xff]
        %v902 = vld [vmem:[%s376 + $0x1e8] sm:$0xff]
        %v903 = vld [vmem:[%s376 + $0x1f0] sm:$0xff]
        %v904 = vld [vmem:[%s376 + $0x1f8] sm:$0xff]
        %v905 = vld [vmem:[%s376 + $0x200] sm:$0xff]
        %v906 = vld [vmem:[%s376 + $0x208] sm:$0xff]
        %v907 = vld [vmem:[%s376 + $0x210] sm:$0xff]
        %v908 = vld [vmem:[%s376 + $0x218] sm:$0xff]
        %v909 = vld [vmem:[%s376 + $0x220] sm:$0xff]
        %v910 = vld [vmem:[%s376 + $0x228] sm:$0xff]
        %v911 = vld [vmem:[%s376 + $0x230] sm:$0xff]
        %v912 = vld [vmem:[%s376 + $0x238] sm:$0xff]
        %v913 = vld [vmem:[%s376 + $0x240] sm:$0xff]
        %v914 = vld [vmem:[%s376 + $0x248] sm:$0xff]
        %v915 = vld [vmem:[%s376 + $0x250] sm:$0xff]
        %v916 = vld [vmem:[%s376 + $0x258] sm:$0xff]
        %v917 = vld [vmem:[%s376 + $0x260] sm:$0xff]
        %v918 = vld [vmem:[%s376 + $0x268] sm:$0xff]
        %v919 = vld [vmem:[%s376 + $0x270] sm:$0xff]
        %v920 = vld [vmem:[%s376 + $0x278] sm:$0xff]
        %v921 = vld [vmem:[%s376 + $0x280] sm:$0xff]
        %v922 = vld [vmem:[%s376 + $0x288] sm:$0xff]
        %v923 = vld [vmem:[%s376 + $0x290] sm:$0xff]
        %v924 = vld [vmem:[%s376 + $0x298] sm:$0xff]
        %v925 = vld [vmem:[%s376 + $0x2a0] sm:$0xff]
        %v926 = vld [vmem:[%s376 + $0x2a8] sm:$0xff]
        %v927 = vld [vmem:[%s376 + $0x2b0] sm:$0xff]
        %v928 = vld [vmem:[%s376 + $0x2b8] sm:$0xff]
        %v929 = vld [vmem:[%s376 + $0x2c0] sm:$0xff]
        %v930 = vld [vmem:[%s376 + $0x2c8] sm:$0xff]
        %v931 = vld [vmem:[%s376 + $0x2d0] sm:$0xff]
        %v932 = vld [vmem:[%s376 + $0x2d8] sm:$0xff]
        %v933 = vld [vmem:[%s376 + $0x2e0] sm:$0xff]
        %v934 = vld [vmem:[%s376 + $0x2e8] sm:$0xff]
        %v935 = vld [vmem:[%s376 + $0x2f0] sm:$0xff]
        %v936 = vld [vmem:[%s376 + $0x2f8] sm:$0xff]
        %v937 = vld [vmem:[%s376 + $0x300] sm:$0xff]
        %v938 = vld [vmem:[%s376 + $0x308] sm:$0xff]
        %v939 = vld [vmem:[%s376 + $0x310] sm:$0xff]
        %v940 = vld [vmem:[%s376 + $0x318] sm:$0xff]
        %v941 = vld [vmem:[%s376 + $0x320] sm:$0xff]
        %v942 = vld [vmem:[%s376 + $0x328] sm:$0xff]
        %v943 = vld [vmem:[%s376 + $0x330] sm:$0xff]
        %v944 = vld [vmem:[%s376 + $0x338] sm:$0xff]
        %v945 = vld [vmem:[%s376 + $0x340] sm:$0xff]
        %v946 = vld [vmem:[%s376 + $0x348] sm:$0xff]
        %v947 = vld [vmem:[%s376 + $0x350] sm:$0xff]
        %v948 = vld [vmem:[%s376 + $0x358] sm:$0xff]
        %v949 = vld [vmem:[%s376 + $0x360] sm:$0xff]
        %v950 = vld [vmem:[%s376 + $0x368] sm:$0xff]
        %v951 = vld [vmem:[%s376 + $0x370] sm:$0xff]
        %v952 = vld [vmem:[%s376 + $0x378] sm:$0xff]
        %v953 = vld [vmem:[%s376 + $0x380] sm:$0xff]
        %v954 = vld [vmem:[%s376 + $0x388] sm:$0xff]
        %v955 = vld [vmem:[%s376 + $0x390] sm:$0xff]
        %v956 = vld [vmem:[%s376 + $0x398] sm:$0xff]
        %v957 = vld [vmem:[%s376 + $0x3a0] sm:$0xff]
        %v958 = vld [vmem:[%s376 + $0x3a8] sm:$0xff]
        %v959 = vld [vmem:[%s376 + $0x3b0] sm:$0xff]
        %v960 = vld [vmem:[%s376 + $0x3b8] sm:$0xff]
        %v961 = vld [vmem:[%s376 + $0x3c0] sm:$0xff]
        %v962 = vld [vmem:[%s376 + $0x3c8] sm:$0xff]
        %v963 = vld [vmem:[%s376 + $0x3d0] sm:$0xff]
        %v964 = vld [vmem:[%s376 + $0x3d8] sm:$0xff]
        %v965 = vld [vmem:[%s376 + $0x3e0] sm:$0xff]
        %v966 = vld [vmem:[%s376 + $0x3e8] sm:$0xff]
        %v967 = vld [vmem:[%s376 + $0x3f0] sm:$0xff]
        %v968 = vld [vmem:[%s376 + $0x3f8] sm:$0xff]
        %v969 = vld [vmem:[%s385] sm:$0x3]
        %v971 = vlaneseq
        %v972 = vshrl.u32 %v971, 7
        %v973 = vsub.s32 0, %v972
        %v974 = vrot.slane %v969, %v973
        %v975 = vlaneseq
        %v976 = vshrl.u32 %v975, 7
        %v977 = vsub.s32 1, %v976
        %v978 = vrot.slane %v969, %v977
        %981 = vmatprep.subr.mxu0 %v872
        %982 = vmatpush1.msra.mxu0 %v871
        %983 = vmatprep.subr.mxu0 %v870
        %984 = vmatpush1.msra.mxu0 %v869
        %985 = vmatprep.subr.mxu0 %v868
        %986 = vmatpush1.msra.mxu0 %v867
        %987 = vmatprep.subr.mxu0 %v866
        %988 = vmatpush1.msra.mxu0 %v865
        %989 = vmatprep.subr.mxu0 %v864
        %990 = vmatpush1.msra.mxu0 %v863
        %991 = vmatprep.subr.mxu0 %v862
        %992 = vmatpush1.msra.mxu0 %v861
        %993 = vmatprep.subr.mxu0 %v860
        %994 = vmatpush1.msra.mxu0 %v859
        %995 = vmatprep.subr.mxu0 %v858
        %996 = vmatpush1.msra.mxu0 %v857
        %997 = vmatprep.subr.mxu0 %v856
        %998 = vmatpush1.msra.mxu0 %v855
        %999 = vmatprep.subr.mxu0 %v854
        %1000 = vmatpush1.msra.mxu0 %v853
        %1001 = vmatprep.subr.mxu0 %v852
        %1002 = vmatpush1.msra.mxu0 %v851
        %1003 = vmatprep.subr.mxu0 %v850
        %1004 = vmatpush1.msra.mxu0 %v849
        %1005 = vmatprep.subr.mxu0 %v848
        %1006 = vmatpush1.msra.mxu0 %v847
        %1007 = vmatprep.subr.mxu0 %v846
        %1008 = vmatpush1.msra.mxu0 %v845
        %1009 = vmatprep.subr.mxu0 %v844
        %1010 = vmatpush1.msra.mxu0 %v843
        %1011 = vmatprep.subr.mxu0 %v842
        %1012 = vmatpush1.msra.mxu0 %v841
        %1013 = vmatprep.subr.mxu0 %v904
        %1014 = vmatpush2.msra.mxu0 %v903
        %1015 = vmatprep.subr.mxu0 %v902
        %1016 = vmatpush2.msra.mxu0 %v901
        %1017 = vmatprep.subr.mxu0 %v900
        %1018 = vmatpush2.msra.mxu0 %v899
        %1019 = vmatprep.subr.mxu0 %v898
        %1020 = vmatpush2.msra.mxu0 %v897
        %1021 = vmatprep.subr.mxu0 %v896
        %1022 = vmatpush2.msra.mxu0 %v895
        %1023 = vmatprep.subr.mxu0 %v894
        %1024 = vmatpush2.msra.mxu0 %v893
        %1025 = vmatprep.subr.mxu0 %v892
        %1026 = vmatpush2.msra.mxu0 %v891
        %1027 = vmatprep.subr.mxu0 %v890
        %1028 = vmatpush2.msra.mxu0 %v889
        %1029 = vmatprep.subr.mxu0 %v888
        %1030 = vmatpush2.msra.mxu0 %v887
        %1031 = vmatprep.subr.mxu0 %v886
        %1032 = vmatpush2.msra.mxu0 %v885
        %1033 = vmatprep.subr.mxu0 %v884
        %1034 = vmatpush2.msra.mxu0 %v883
        %1035 = vmatprep.subr.mxu0 %v882
        %1036 = vmatpush2.msra.mxu0 %v881
        %1037 = vmatprep.subr.mxu0 %v880
        %1038 = vmatpush2.msra.mxu0 %v879
        %1039 = vmatprep.subr.mxu0 %v878
        %1040 = vmatpush2.msra.mxu0 %v877
        %1041 = vmatprep.subr.mxu0 %v876
        %1042 = vmatpush2.msra.mxu0 %v875
        %1043 = vmatprep.subr.mxu0 %v874
        %1044 = vmatpush2.msra.mxu0 %v873
        %1045 = vmatprep.mubr.f32.mxu0 %v834
        %1046 = vmatmul.mubr.f32.gmra.mxu0 %v833
        %v1047 = vpop.f32.mrf.mxu0
        %v1048 = vadd.f32 %v974, %v1047
        %v1049 = vpop.f32.mrf.mxu0
        %v1050 = vadd.f32 %v978, %v1049
        %1051 = vmatprep.mubr.f32.mxu0 %v838
        %1052 = vmatmul.mubr.f32.gmra.mxu0 %v837
        %v1053 = vpop.f32.mrf.mxu0
        %v1054 = vadd.f32 %v974, %v1053
        %v1055 = vpop.f32.mrf.mxu0
        %v1056 = vadd.f32 %v978, %v1055
        %1057 = vdwg.mxu0
        %1058 = vmatprep.subr.mxu0 %v936
        %1059 = vmatpush1.msra.mxu0 %v935
        %1060 = vmatprep.subr.mxu0 %v934
        %1061 = vmatpush1.msra.mxu0 %v933
        %1062 = vmatprep.subr.mxu0 %v932
        %1063 = vmatpush1.msra.mxu0 %v931
        %1064 = vmatprep.subr.mxu0 %v930
        %1065 = vmatpush1.msra.mxu0 %v929
        %1066 = vmatprep.subr.mxu0 %v928
        %1067 = vmatpush1.msra.mxu0 %v927
        %1068 = vmatprep.subr.mxu0 %v926
        %1069 = vmatpush1.msra.mxu0 %v925
        %1070 = vmatprep.subr.mxu0 %v924
        %1071 = vmatpush1.msra.mxu0 %v923
        %1072 = vmatprep.subr.mxu0 %v922
        %1073 = vmatpush1.msra.mxu0 %v921
        %1074 = vmatprep.subr.mxu0 %v920
        %1075 = vmatpush1.msra.mxu0 %v919
        %1076 = vmatprep.subr.mxu0 %v918
        %1077 = vmatpush1.msra.mxu0 %v917
        %1078 = vmatprep.subr.mxu0 %v916
        %1079 = vmatpush1.msra.mxu0 %v915
        %1080 = vmatprep.subr.mxu0 %v914
        %1081 = vmatpush1.msra.mxu0 %v913
        %1082 = vmatprep.subr.mxu0 %v912
        %1083 = vmatpush1.msra.mxu0 %v911
        %1084 = vmatprep.subr.mxu0 %v910
        %1085 = vmatpush1.msra.mxu0 %v909
        %1086 = vmatprep.subr.mxu0 %v908
        %1087 = vmatpush1.msra.mxu0 %v907
        %1088 = vmatprep.subr.mxu0 %v906
        %1089 = vmatpush1.msra.mxu0 %v905
        %1090 = vmatprep.subr.mxu0 %v968
        %1091 = vmatpush2.msra.mxu0 %v967
        %1092 = vmatprep.subr.mxu0 %v966
        %1093 = vmatpush2.msra.mxu0 %v965
        %1094 = vmatprep.subr.mxu0 %v964
        %1095 = vmatpush2.msra.mxu0 %v963
        %1096 = vmatprep.subr.mxu0 %v962
        %1097 = vmatpush2.msra.mxu0 %v961
        %1098 = vmatprep.subr.mxu0 %v960
        %1099 = vmatpush2.msra.mxu0 %v959
        %1100 = vmatprep.subr.mxu0 %v958
        %1101 = vmatpush2.msra.mxu0 %v957
        %1102 = vmatprep.subr.mxu0 %v956
        %1103 = vmatpush2.msra.mxu0 %v955
        %1104 = vmatprep.subr.mxu0 %v954
        %1105 = vmatpush2.msra.mxu0 %v953
        %1106 = vmatprep.subr.mxu0 %v952
        %1107 = vmatpush2.msra.mxu0 %v951
        %1108 = vmatprep.subr.mxu0 %v950
        %1109 = vmatpush2.msra.mxu0 %v949
        %1110 = vmatprep.subr.mxu0 %v948
        %1111 = vmatpush2.msra.mxu0 %v947
        %1112 = vmatprep.subr.mxu0 %v946
        %1113 = vmatpush2.msra.mxu0 %v945
        %1114 = vmatprep.subr.mxu0 %v944
        %1115 = vmatpush2.msra.mxu0 %v943
        %1116 = vmatprep.subr.mxu0 %v942
        %1117 = vmatpush2.msra.mxu0 %v941
        %1118 = vmatprep.subr.mxu0 %v940
        %1119 = vmatpush2.msra.mxu0 %v939
        %1120 = vmatprep.subr.mxu0 %v938
        %1121 = vmatpush2.msra.mxu0 %v937
        %1122 = vmatprep.mubr.f32.mxu0 %v836
        %1123 = vmatmul.mubr.f32.gmra.mxu0 %v835
        %v1124 = vpop.f32.mrf.mxu0
        %v1125 = vadd.f32 %v1048, %v1124
        %v1126 = vpop.f32.mrf.mxu0
        %v1127 = vadd.f32 %v1050, %v1126
        %1128 = vmatprep.mubr.f32.mxu0 %v840
        %1129 = vmatmul.mubr.f32.gmra.mxu0 %v839
        %v1130 = vpop.f32.mrf.mxu0
        %v1131 = vadd.f32 %v1054, %v1130
        %v1132 = vpop.f32.mrf.mxu0
        %v1133 = vadd.f32 %v1056, %v1132
        %1134 = vdwg.mxu0
        %1135 = vst [vmem:[%s420] sm:$0xff] %v1125
        %1136 = vst [vmem:[%s420 + $0x8] sm:$0xff] %v1127
        %1137 = vst [vmem:[%s420 + $0x10] sm:$0xff] %v1131
        %1138 = vst [vmem:[%s420 + $0x18] sm:$0xff] %v1133
        %s1139 = sand.u32 %s211, 1
        %s1140 = scalar_lea.sflag [#allocation5], %s1139
        %s1141 = sand.u32 %s211, 1
        %s1142 = smul.addr %s1141, 32
        %s1143 = scalar_lea.vmem [#allocation15], %s1142
        // Predicated region
        $region81: #{_mlm_head_forward.1} parent=47 // pred_check
          %p1144 = pneg %p221
        $region82: #{_mlm_head_forward.1} parent=47 // pred_check_branch
          %1146 = sbr.rel (%p1144) target = $region84
        $region83: #{_mlm_head_forward.1} parent=47 // pred_region
          %s1147 = smul.u32 2, %s31
          %s1148 = smul.u32 2, %s32
          %s1150 = ssub.s32 512, 512
          %1151 = vsyncadd %s1140, %s1150
          %s1152 = smul.addr %s1147, 8
          %s1153 = sadd.s32 %s1148, %s1152
          %s1154 = smul.addr %s1153, 128
          %s1155 = scalar_lea.hbm %s7, %s1154
          %s1156 = sshll.u32 %s1143, 4
          %s1157 = int_to_ptr.vmem [resolvable:$true] %s1156
          %1162 = dma.vmem_to_hbm [thread:$0]  %s1157, 512, %s1155, %s1140, 256, 1024, 16
        $region84: #{_mlm_head_forward.1} parent=47 // pred_fallthru
          _
      $region48: #{_mlm_head_forward.1} parent=5 // pred_fallthru
        _
      %p1163 = scmp.le.s32.totalorder 2, %s22
      // Predicated region
      $region85: #{_mlm_head_forward.1} parent=5 // pred_check
        %p1164 = pneg %p1163
      $region86: #{_mlm_head_forward.1} parent=5 // pred_check_branch
        %1166 = sbr.rel (%p1164) target = $region88
      $region87: #{_mlm_head_forward.1} parent=5 // pred_region
        %s1167 = ssub.s32 %s22, 2
        // Predicated region
        $region89: #{_mlm_head_forward.1} parent=87 // pred_check
          %p1168 = pneg %p227
        $region90: #{_mlm_head_forward.1} parent=87 // pred_check_branch
          %1170 = sbr.rel (%p1168) target = $region92
        $region91: #{_mlm_head_forward.1} parent=87 // pred_region
          %s1171 = sand.u32 %s212, 1
          %s1172 = scalar_lea.sflag [#allocation5], %s1171
          %s1173 = sand.u32 %s212, 1
          %s1174 = smul.addr %s1173, 32
          %s1175 = scalar_lea.vmem [#allocation15], %s1174
          %1176 = dma.done %s1172, 512
        $region92: #{_mlm_head_forward.1} parent=87 // pred_fallthru
          _
      $region88: #{_mlm_head_forward.1} parent=5 // pred_fallthru
        _
    $region6: #{_mlm_head_forward.1} parent=1 // loop_footer
      %s26 = sadd.s32 1, %s22
    $region7: #{_mlm_head_forward.1} parent=1 // loop_footer_branch
      %21 = sbr.rel target = $region3
    $region8: #{_mlm_head_forward.1} parent=1 // loop_exit
      _
    %1177 = vsyncpa [#allocation4], 1
    %s1178 = scalar_lea.sflag [#allocation4], 1
    %1179 = vsyncpa %s1178, 1
    %1180 = vsyncpa [#allocation7], 1
    %1181 = vsyncpa [#allocation10], 1
    %1182 = vsyncpa [#allocation13], 1
    %s1183 = scalar_lea.sflag [#allocation13], 1
    %1184 = vsyncpa %s1183, 1
    %1185 = vsyncpa [#allocation5], 1
    %s1186 = scalar_lea.sflag [#allocation5], 1
    %1187 = vsyncpa %s1186, 1

</llo_original>
